<compile_context>
chip_gen: v6e
topology: v6e:2x2x1
jax: 0.10.0
libtpu: 0.0.40
codegen_flags: <defaults>
</compile_context>

<pallas_src>
import functools

import jax
import jax.numpy as jnp
from jax import lax
from jax.experimental import pallas as pl
from jax.experimental.pallas import tpu as pltpu


def _round_up(x: int, m: int) -> int:
    return (x + m - 1) // m * m


def _make_embeddings_kernel(ts: int, batch: int):
    """Kernel factory; `ts` (seq tile) and `batch` (B) are static ints."""

    def kernel(tok_ref, wpe_ref, wte_hbm, out_ref, sem):
        # tok_ref : SMEM (S_pad*B,) int32  scalar-prefetched tokens, seq-major (idx = s*B + b)
        # wpe_ref : VMEM (ts, H)           position-embedding tile for this step
        # wte_hbm : ANY  (V, H)            token table, stays in HBM; rows gathered via DMA
        # out_ref : VMEM (ts, B, H)        output block for sequence tile i
        # sem     : DMA semaphore (shared by all row gathers of this step)
        base = pl.program_id(0) * (ts * batch)

        def row_copy(s_local, b):
            tok = tok_ref[base + s_local * batch + b]
            return pltpu.make_async_copy(
                wte_hbm.at[pl.ds(tok, 1), :],          # (1, H) row of wte in HBM
                out_ref.at[s_local, pl.ds(b, 1), :],   # (1, H) row of the output block
                sem,
            )

        # Issue all ts*B row-gather DMAs (data-dependent addresses from SMEM
        # scalars); they all fly concurrently and overlap the previous tile's
        # pipelined writeback.
        def issue(s_local, carry):
            for b in range(batch):      # batch is small & static -> unrolled
                row_copy(s_local, b).start()
            return carry

        lax.fori_loop(0, ts, issue, 0)

        # Drain: one wait per issued copy (same-size transfers on the shared
        # semaphore).  Waits reference the real destination slices so the
        # full-block read below is ordered after every gather.
        def drain(s_local, carry):
            for b in range(batch):
                row_copy(s_local, b).wait()
            return carry

        lax.fori_loop(0, ts, drain, 0)

        # hidden[i*ts + s, b, :] = wte[tokens[b, s_glob]] + wpe[s_glob]
        # (sublane-broadcast add of the (ts, H) wpe tile over the batch dim).
        out_ref[...] = (out_ref[...] + wpe_ref[...][:, None, :]).astype(out_ref.dtype)

    return kernel


@functools.partial(jax.jit, static_argnames=("block_seq",))
def gpt_embeddings_forward(input_ids, wte, wpe, *, block_seq=None):
    """Pallas implementation of GPTEmbeddings_.forward.

    Returns (hidden_states [S, B, H], labels [B, S]).
    hidden_dropout = 0.0 so dropout is the identity.
    """
    B, S_total = input_ids.shape
    S = S_total - 1
    V, H = wte.shape
    P = wpe.shape[0]
    assert S >= 1 and S <= P, "sequence length exceeds wpe rows"
    dtype = wte.dtype
    dsize = jnp.dtype(dtype).itemsize

    tokens = input_ids[:, :-1]          # [B, S]  (glue: slicing)
    labels = input_ids[:, 1:]           # [B, S]  (glue: slicing / .clone())

    # ---- choose the sequence tile TS -------------------------------------
    if block_seq is None:
        # Cap per-step gather descriptors (ts*B) and double-buffered VMEM use.
        ts_desc = max(1, 2048 // max(B, 1))
        ts_vmem = max(1, (24 * 2**20) // (2 * (B + 1) * H * dsize))
        block_seq = max(8, min(256, ts_desc, ts_vmem))
    if S >= 8:
        ts = max(8, (min(block_seq, S) // 8) * 8)   # multiple of 8, <= S
    else:
        ts = S                                       # single full-extent tile
    n_tiles = pl.cdiv(S, ts)
    s_pad = n_tiles * ts

    # Seq-major flat token ids (row r = s*B + b holds tokens[b, s]), padded to
    # the tiled extent so every gather in a partial last tile reads a valid id.
    # Clamp so a bad id can never drive an out-of-bounds gather DMA.
    tokens_flat = (
        jnp.clip(jnp.transpose(tokens), 0, V - 1).astype(jnp.int32).reshape(S * B)
    )
    if s_pad > S:
        tokens_flat = jnp.pad(tokens_flat, (0, (s_pad - S) * B))

    # wpe table covering positions [0, s_pad) so the (ts, H) block spec is
    # always legal (ts multiple of 8, or ts == full first dim).
    if s_pad > P:
        wpe_in = jnp.pad(wpe, ((0, s_pad - P), (0, 0)))
    elif ts % 8 != 0:                  # single non-8-aligned tile (S < 8)
        wpe_in = wpe[:s_pad]
    else:
        wpe_in = wpe

    block_bytes = ts * (B + 1) * H * dsize
    vmem_limit = int(min(64 * 2**20, max(32 * 2**20, 3 * block_bytes)))

    hidden_states = pl.pallas_call(
        _make_embeddings_kernel(ts, B),
        out_shape=jax.ShapeDtypeStruct((S, B, H), dtype),
        grid_spec=pltpu.PrefetchScalarGridSpec(
            num_scalar_prefetch=1,          # tokens_flat -> SMEM, feeds DMA addresses
            grid=(n_tiles,),                # one sequence tile of TS positions per step
            in_specs=[
                # wpe tile aligned with the output tile (auto-pipelined).
                pl.BlockSpec((ts, H), lambda i, toks: (i, 0)),
                # wte stays in HBM; rows are gathered manually inside the kernel.
                pl.BlockSpec(memory_space=pl.ANY),
            ],
            # Lane-dense output block: (ts, B, H) of the [S, B, H] output
            # (last two dims are the full B and H extents).
            out_specs=pl.BlockSpec((ts, B, H), lambda i, toks: (i, 0, 0)),
            scratch_shapes=[pltpu.SemaphoreType.DMA(())],
        ),
        compiler_params=pltpu.CompilerParams(
            # No cross-step kernel state -> safe to split the sequence-tile
            # axis across TensorCores (2x on v7x).
            dimension_semantics=("parallel",),
            vmem_limit_bytes=vmem_limit,
        ),
    )(tokens_flat, wpe_in, wte)

    # sequence_parallel=False path; dropout(p=0.0) is identity.
    # TODO(synk): tensor-parallel sequence scatter + cuda-rng-tracker dropout fork have
    # no single-device Pallas equivalent and are skipped (sequence_parallel=False).
    return hidden_states, labels


if __name__ == "__main__":
    # Small, module-consistent shapes (several grid steps to exercise tiling).
    B = 2            # batch
    S_TOTAL = 33     # input_ids seq length -> tokens/labels length S = 32
    VOCAB = 64       # wte rows
    MAX_POS = 32     # wpe rows
    H = 128          # hidden size

    key = jax.random.PRNGKey(0)
    k_ids, k_wte, k_wpe = jax.random.split(key, 3)

    input_ids = jax.random.randint(k_ids, (B, S_TOTAL), 0, VOCAB, dtype=jnp.int32)
    wte = jax.random.normal(k_wte, (VOCAB, H), dtype=jnp.float32) * 0.02
    wpe = jax.random.normal(k_wpe, (MAX_POS, H), dtype=jnp.float32) * 0.02

    # block_seq=8 -> 4 sequence tiles in the grid for this toy size.
    hidden_states, labels = gpt_embeddings_forward(input_ids, wte, wpe, block_seq=8)
    jax.block_until_ready((hidden_states, labels))

    # Pure-JAX reference check.
    tokens_ref = input_ids[:, :-1]
    labels_ref = input_ids[:, 1:]
    S = S_TOTAL - 1
    ref_hidden = wte[tokens_ref] + wpe[jnp.arange(S)][None, :, :]   # [B, S, H]
    ref_hidden = jnp.transpose(ref_hidden, (1, 0, 2))               # [S, B, H]

    assert hidden_states.shape == (S, B, H)
    assert labels.shape == (B, S)
    assert jnp.allclose(hidden_states, ref_hidden, atol=1e-5, rtol=1e-5)
    assert jnp.array_equal(labels, labels_ref)

    print("KERNEL_OK")
</pallas_src>

<mosaic_0001>
module attributes {stable_mosaic.version = 11 : i64} {
  func.func @kernel(%arg0: i32, %arg1: memref<64xi32, #tpu.memory_space<smem>>, %arg2: memref<8x128xf32, #tpu.memory_space<vmem>>, %arg3: memref<64x128xf32, #tpu.memory_space<any>>, %arg4: memref<8x2x128xf32, #tpu.memory_space<vmem>>, %arg5: memref<!tpu.dma_semaphore, #tpu.memory_space<semaphore_mem>>) attributes {dimension_semantics = [#tpu.dimension_semantics<parallel>], iteration_bounds = array<i64: 4>, scalar_prefetch = 1 : i64, scratch_operands = 1 : i64, tpu.core_type = #tpu.core_type<tc>, window_params = [{transform_indices = @transform_0, window_bounds = array<i64: 8, 128>}, {}, {transform_indices = @transform_2, window_bounds = array<i64: 8, 2, 128>}]} {
    %c16_i32 = arith.constant 16 : i32
    %0 = arith.muli %arg0, %c16_i32 : i32
    %c0_i32 = arith.constant 0 : i32
    %c8_i32 = arith.constant 8 : i32
    %1 = arith.addi %c0_i32, %c8_i32 : i32
    %c1_i32 = arith.constant 1 : i32
    scf.for %arg6 = %c0_i32 to %1 step %c1_i32  : i32 {
      %c2_i32 = arith.constant 2 : i32
      %9 = arith.muli %arg6, %c2_i32 : i32
      %10 = arith.addi %0, %9 : i32
      %c0_i32_12 = arith.constant 0 : i32
      %11 = arith.addi %10, %c0_i32_12 : i32
      %12 = arith.index_cast %11 : i32 to index
      %13 = memref.load %arg1[%12] : memref<64xi32, #tpu.memory_space<smem>>
      %c0_i32_13 = arith.constant 0 : i32
      %14 = tpu.memref_slice %arg3[%13, %c0_i32_13] : memref<64x128xf32, #tpu.memory_space<any>> -> memref<1x128xf32, #tpu.memory_space<any>>
      %c0_i32_14 = arith.constant 0 : i32
      %c0_i32_15 = arith.constant 0 : i32
      %15 = tpu.memref_slice %arg4[%arg6, %c0_i32_14, %c0_i32_15] : memref<8x2x128xf32, #tpu.memory_space<vmem>> -> memref<1x1x128xf32, #tpu.memory_space<vmem>>
      %16 = tpu.memref_squeeze %15 : memref<1x1x128xf32, #tpu.memory_space<vmem>> -> memref<1x128xf32, #tpu.memory_space<vmem>>
      tpu.enqueue_dma source(%14 : memref<1x128xf32, #tpu.memory_space<any>>) target(%16 : memref<1x128xf32, #tpu.memory_space<vmem>>) target_semaphore(%arg5 : memref<!tpu.dma_semaphore, #tpu.memory_space<semaphore_mem>>)
      %c2_i32_16 = arith.constant 2 : i32
      %17 = arith.muli %arg6, %c2_i32_16 : i32
      %18 = arith.addi %0, %17 : i32
      %c1_i32_17 = arith.constant 1 : i32
      %19 = arith.addi %18, %c1_i32_17 : i32
      %20 = arith.index_cast %19 : i32 to index
      %21 = memref.load %arg1[%20] : memref<64xi32, #tpu.memory_space<smem>>
      %c0_i32_18 = arith.constant 0 : i32
      %22 = tpu.memref_slice %arg3[%21, %c0_i32_18] : memref<64x128xf32, #tpu.memory_space<any>> -> memref<1x128xf32, #tpu.memory_space<any>>
      %c1_i32_19 = arith.constant 1 : i32
      %c0_i32_20 = arith.constant 0 : i32
      %23 = tpu.memref_slice %arg4[%arg6, %c1_i32_19, %c0_i32_20] : memref<8x2x128xf32, #tpu.memory_space<vmem>> -> memref<1x1x128xf32, #tpu.memory_space<vmem>>
      %24 = tpu.memref_squeeze %23 : memref<1x1x128xf32, #tpu.memory_space<vmem>> -> memref<1x128xf32, #tpu.memory_space<vmem>>
      tpu.enqueue_dma source(%22 : memref<1x128xf32, #tpu.memory_space<any>>) target(%24 : memref<1x128xf32, #tpu.memory_space<vmem>>) target_semaphore(%arg5 : memref<!tpu.dma_semaphore, #tpu.memory_space<semaphore_mem>>)
    }
    %c8_i32_0 = arith.constant 8 : i32
    %c0_i32_1 = arith.constant 0 : i32
    %c8_i32_2 = arith.constant 8 : i32
    %2 = arith.addi %c0_i32_1, %c8_i32_2 : i32
    %c1_i32_3 = arith.constant 1 : i32
    scf.for %arg6 = %c0_i32_1 to %2 step %c1_i32_3  : i32 {
      %c2_i32 = arith.constant 2 : i32
      %9 = arith.muli %arg6, %c2_i32 : i32
      %10 = arith.addi %0, %9 : i32
      %c0_i32_12 = arith.constant 0 : i32
      %11 = arith.addi %10, %c0_i32_12 : i32
      %12 = arith.index_cast %11 : i32 to index
      %13 = memref.load %arg1[%12] : memref<64xi32, #tpu.memory_space<smem>>
      %c0_i32_13 = arith.constant 0 : i32
      %14 = tpu.memref_slice %arg3[%13, %c0_i32_13] : memref<64x128xf32, #tpu.memory_space<any>> -> memref<1x128xf32, #tpu.memory_space<any>>
      %c0_i32_14 = arith.constant 0 : i32
      %c0_i32_15 = arith.constant 0 : i32
      %15 = tpu.memref_slice %arg4[%arg6, %c0_i32_14, %c0_i32_15] : memref<8x2x128xf32, #tpu.memory_space<vmem>> -> memref<1x1x128xf32, #tpu.memory_space<vmem>>
      %16 = tpu.memref_squeeze %15 : memref<1x1x128xf32, #tpu.memory_space<vmem>> -> memref<1x128xf32, #tpu.memory_space<vmem>>
      tpu.wait_dma2 semaphore(%arg5 : memref<!tpu.dma_semaphore, #tpu.memory_space<semaphore_mem>>) src(%14 : memref<1x128xf32, #tpu.memory_space<any>>) dst(%16 : memref<1x128xf32, #tpu.memory_space<vmem>>)
      %c2_i32_16 = arith.constant 2 : i32
      %17 = arith.muli %arg6, %c2_i32_16 : i32
      %18 = arith.addi %0, %17 : i32
      %c1_i32_17 = arith.constant 1 : i32
      %19 = arith.addi %18, %c1_i32_17 : i32
      %20 = arith.index_cast %19 : i32 to index
      %21 = memref.load %arg1[%20] : memref<64xi32, #tpu.memory_space<smem>>
      %c0_i32_18 = arith.constant 0 : i32
      %22 = tpu.memref_slice %arg3[%21, %c0_i32_18] : memref<64x128xf32, #tpu.memory_space<any>> -> memref<1x128xf32, #tpu.memory_space<any>>
      %c1_i32_19 = arith.constant 1 : i32
      %c0_i32_20 = arith.constant 0 : i32
      %23 = tpu.memref_slice %arg4[%arg6, %c1_i32_19, %c0_i32_20] : memref<8x2x128xf32, #tpu.memory_space<vmem>> -> memref<1x1x128xf32, #tpu.memory_space<vmem>>
      %24 = tpu.memref_squeeze %23 : memref<1x1x128xf32, #tpu.memory_space<vmem>> -> memref<1x128xf32, #tpu.memory_space<vmem>>
      tpu.wait_dma2 semaphore(%arg5 : memref<!tpu.dma_semaphore, #tpu.memory_space<semaphore_mem>>) src(%22 : memref<1x128xf32, #tpu.memory_space<any>>) dst(%24 : memref<1x128xf32, #tpu.memory_space<vmem>>)
    }
    %c8_i32_4 = arith.constant 8 : i32
    %c0 = arith.constant 0 : index
    %c0_5 = arith.constant 0 : index
    %c0_6 = arith.constant 0 : index
    %3 = vector.load %arg4[%c0, %c0_5, %c0_6] : memref<8x2x128xf32, #tpu.memory_space<vmem>>, vector<8x2x128xf32>
    %c0_7 = arith.constant 0 : index
    %c0_8 = arith.constant 0 : index
    %4 = vector.load %arg2[%c0_7, %c0_8] : memref<8x128xf32, #tpu.memory_space<vmem>>, vector<8x128xf32>
    %5 = vector.shape_cast %4 : vector<8x128xf32> to vector<8x1x128xf32>
    %6 = vector.broadcast %5 : vector<8x1x128xf32> to vector<8x2x128xf32>
    %7 = arith.addf %3, %6 : vector<8x2x128xf32>
    %c0_9 = arith.constant 0 : index
    %c0_10 = arith.constant 0 : index
    %c0_11 = arith.constant 0 : index
    %8 = vector.load %arg4[%c0_9, %c0_10, %c0_11] : memref<8x2x128xf32, #tpu.memory_space<vmem>>, vector<8x2x128xf32>
    tpu.vector_store %arg4[%c0_9, %c0_10, %c0_11], %7 {strides = array<i32>} : memref<8x2x128xf32, #tpu.memory_space<vmem>>, vector<8x2x128xf32>,
    return
  }
  func.func @transform_0(%arg0: i32, %arg1: memref<64xi32, #tpu.memory_space<smem>>) -> (i32, i32) {
    %c0_i32 = arith.constant 0 : i32
    %c0_i32_0 = arith.constant 0 : i32
    return %arg0, %c0_i32 : i32, i32
  }
  func.func @transform_2(%arg0: i32, %arg1: memref<64xi32, #tpu.memory_space<smem>>) -> (i32, i32, i32) {
    %c0_i32 = arith.constant 0 : i32
    %c0_i32_0 = arith.constant 0 : i32
    %c0_i32_1 = arith.constant 0 : i32
    return %arg0, %c0_i32, %c0_i32_0 : i32, i32, i32
  }
}

</mosaic_0001>

<llo_original>
// kernel: gpt_embeddings_forward.1
$region0: #{gpt_embeddings_forward.1}
  #allocation0 [shape = 'u32[]', space=smem, size = 0x4, offset = 0x4, fixed_abs, tag = 'smem constant byte address 0x4 - core index']
  #allocation1 [shape = 'u32[144,128]{1,0:T(1,128)}', space=vmem, size = 0x12000, scoped, tag = 'internal scratch']
  #allocation2 [shape = 's32[1]{0}', space=sflag, size = 0x4, scoped, tag = 'scratch operand']
  #allocation3 [shape = 's32[1]{0}', space=sflag, size = 0x4, scoped, tag = 'scoped memory for gpt_embeddings_forward.1']
  #allocation4 [shape = 'u8[512]{0}', space=smem, size = 0x200, scoped, tag = 'prefetched SMEM operand 0']
  #allocation9 [shape = 's32[]', space=sflag, size = 0x4, offset = 0, fixed_abs, tag = 'sflag constant byte address 0x0 - dummy sync flag']
  #allocation10 [shape = 's32[]', space=sflag, size = 0x4, offset = 0, fixed_abs, tag = 'sflag constant byte address 0x0 - dummy sync flag']
  %s0 = inlined_call_operand.vmem [shape: s32[64], index: 0, kind: input, shape index: {}]
  %s1 = inlined_call_operand.hbm [shape: f32[32,128], index: 1, kind: input, shape index: {}]
  %s2 = inlined_call_operand.vmem [shape: f32[64,128], index: 2, kind: input, shape index: {}]
  %s3 = inlined_call_operand.hbm [shape: f32[32,2,128], index: 3, kind: output, shape index: {}]
  %s4 = sld [smem:[#allocation0]]
  $region115: #{gpt_embeddings_forward.1} parent=0
    _
  %s6 = ssub.s32 1, %s4
  %s7 = scalar_select 0, %s6, %s4
  %s8 = sshll.u32 %s0, 4
  %s9 = int_to_ptr.vmem [resolvable:$true] %s8
  %11 = dma.vmem_to_smem %s9, 16, [#allocation4], [#allocation3]
  %12 = dma.done [#allocation3], 16
  %13 = sfence
  $region1: #{gpt_embeddings_forward.1} parent=0
    #allocation5 [shape = 'u8[8192]{0}', space=vmem, size = 0x2000, scoped, tag = 'input window, operand 1']
    #allocation6 [shape = 's32[2]{0}', space=sflag, size = 0x8, scoped, tag = 'scoped memory for gpt_embeddings_forward.1']
    #allocation7 [shape = 's32[2]{0}', space=sflag, size = 0x8, scoped, tag = 'scoped memory for gpt_embeddings_forward.1']
    #allocation8 [shape = 'u8[16384]{0}', space=vmem, size = 0x4000, scoped, tag = 'output window, operand 0']
    %14 = vsyncpa [#allocation6], 0
    %s15 = scalar_lea.sflag [#allocation6], 1
    %16 = vsyncpa %s15, 0
    %17 = vsyncpa [#allocation7], 0
    %s18 = scalar_lea.sflag [#allocation7], 1
    %19 = vsyncpa %s18, 0
    loop: start=0, step=1, limit=6
    $region2: #{gpt_embeddings_forward.1} parent=1 // loop_pre_header
      _
    $region3: #{gpt_embeddings_forward.1} parent=1 // loop_header
      %s21 = sphi 0, %s25
      %p22 = scmp.ge.s32.totalorder %s21, 6
      %s31 = sphi 0, %s33
      %s34 = sphi 0, %s31
      %s35 = sphi 0, %s34
      %s51 = sphi 0, %s35
      %s57 = sphi 0, %s59
      %s60 = sphi 0, %s57
      %s61 = sphi 0, %s60
      %s77 = sphi 0, %s61
    $region4: #{gpt_embeddings_forward.1} parent=1 // loop_header_branch
      %24 = sbr.rel (%p22) target = $region8
    $region5: #{gpt_embeddings_forward.1} parent=1 // loop_body
      %s26 = ssub.s32 %s21, 1
      %s27 = ssub.s32 %s21, 2
      %s28 = sadd.s32 %s21, 1
      %s29 = ssub.s32 %s21, %s28
      %p30 = scmp.eq.s32.totalorder %s29, 0
      %s32 = sadd.s32 %s31, 1
      %s33 = scalar_select %p30, %s31, %s32
      %p36 = pneg %p30
      %p37 = scmp.eq.s32.totalorder %s21, 3
      %p38 = por %p36, %p37
      %p39 = scmp.ne.s32.totalorder %s31, %s34
      %p40 = scmp.eq.s32.totalorder %s21, 0
      %p41 = por %p39, %p40
      %p42 = scmp.ne.s32.totalorder %s31, %s34
      %p43 = scmp.eq.s32.totalorder %s26, 3
      %p44 = por %p42, %p43
      %p45 = scmp.ne.s32.totalorder %s34, %s35
      %p46 = scmp.eq.s32.totalorder %s26, 0
      %p47 = por %p45, %p46
      %p48 = scmp.ne.s32.totalorder %s34, %s35
      %p49 = scmp.eq.s32.totalorder %s27, 3
      %p50 = por %p48, %p49
      %p52 = scmp.ne.s32.totalorder %s35, %s51
      %p53 = scmp.eq.s32.totalorder %s27, 0
      %p54 = por %p52, %p53
      %s55 = ssub.s32 %s21, %s28
      %p56 = scmp.eq.s32.totalorder %s55, 0
      %s58 = sadd.s32 %s57, 1
      %s59 = scalar_select %p56, %s57, %s58
      %p62 = pneg %p56
      %p63 = scmp.eq.s32.totalorder %s21, 3
      %p64 = por %p62, %p63
      %p65 = scmp.ne.s32.totalorder %s57, %s60
      %p66 = scmp.eq.s32.totalorder %s21, 0
      %p67 = por %p65, %p66
      %p68 = scmp.ne.s32.totalorder %s57, %s60
      %p69 = scmp.eq.s32.totalorder %s26, 3
      %p70 = por %p68, %p69
      %p71 = scmp.ne.s32.totalorder %s60, %s61
      %p72 = scmp.eq.s32.totalorder %s26, 0
      %p73 = por %p71, %p72
      %p74 = scmp.ne.s32.totalorder %s60, %s61
      %p75 = scmp.eq.s32.totalorder %s27, 3
      %p76 = por %p74, %p75
      %p78 = scmp.ne.s32.totalorder %s61, %s77
      %p79 = scmp.eq.s32.totalorder %s27, 0
      %p80 = por %p78, %p79
      %p81 = scmp.le.s32.totalorder 1, %s21
      %p82 = scmp.lt.s32.totalorder %s21, 5
      %p83 = pnand %p81, %p82
      %p84 = pneg %p83
      // Predicated region
      $region9: #{gpt_embeddings_forward.1} parent=5 // pred_check
        _
      $region10: #{gpt_embeddings_forward.1} parent=5 // pred_check_branch
        %86 = sbr.rel (%p83) target = $region12
      $region11: #{gpt_embeddings_forward.1} parent=5 // pred_region
        %s87 = ssub.s32 %s21, 1
      $region12: #{gpt_embeddings_forward.1} parent=5 // pred_fallthru
        _
      %p88 = scmp.lt.s32.totalorder %s21, 4
      // Predicated region
      $region13: #{gpt_embeddings_forward.1} parent=5 // pred_check
        %p89 = pneg %p88
      $region14: #{gpt_embeddings_forward.1} parent=5 // pred_check_branch
        %91 = sbr.rel (%p89) target = $region16
      $region15: #{gpt_embeddings_forward.1} parent=5 // pred_region
        // Predicated region
        $region17: #{gpt_embeddings_forward.1} parent=15 // pred_check
          %p92 = pneg %p41
        $region18: #{gpt_embeddings_forward.1} parent=15 // pred_check_branch
          %94 = sbr.rel (%p92) target = $region20
        $region19: #{gpt_embeddings_forward.1} parent=15 // pred_region
          %s95 = sand.u32 %s31, 1
          %s96 = scalar_lea.sflag [#allocation6], %s95
          %s97 = sand.u32 %s31, 1
          %s98 = smul.addr %s97, 8
          %s99 = scalar_lea.vmem [#allocation5], %s98
          %s101 = ssub.s32 128, 128
          %102 = vsyncadd %s96, %s101
          %s103 = smul.addr %s21, 128
          %s104 = scalar_lea.hbm %s1, %s103
          %s106 = sshll.u32 %s99, 4
          %s107 = int_to_ptr.vmem [resolvable:$true] %s106
          %109 = dma.hbm_to_vmem [thread:$0]  %s104, 128, %s107, %s96
        $region20: #{gpt_embeddings_forward.1} parent=15 // pred_fallthru
          _
      $region16: #{gpt_embeddings_forward.1} parent=5 // pred_fallthru
        _
      %p110 = scmp.le.s32.totalorder 1, %s21
      %p111 = scmp.lt.s32.totalorder %s21, 5
      %p112 = pnand %p110, %p111
      %p113 = pneg %p112
      // Predicated region
      $region21: #{gpt_embeddings_forward.1} parent=5 // pred_check
        _
      $region22: #{gpt_embeddings_forward.1} parent=5 // pred_check_branch
        %115 = sbr.rel (%p112) target = $region24
      $region23: #{gpt_embeddings_forward.1} parent=5 // pred_region
        %s116 = ssub.s32 %s21, 1
        %s117 = sand.u32 %s34, 1
        %s118 = scalar_lea.sflag [#allocation6], %s117
        %s119 = sand.u32 %s34, 1
        %s120 = smul.addr %s119, 8
        %s121 = scalar_lea.vmem [#allocation5], %s120
        // Predicated region
        $region25: #{gpt_embeddings_forward.1} parent=23 // pred_check
          %p122 = pneg %p47
        $region26: #{gpt_embeddings_forward.1} parent=23 // pred_check_branch
          %124 = sbr.rel (%p122) target = $region28
        $region27: #{gpt_embeddings_forward.1} parent=23 // pred_region
          %125 = dma.done %s118, 128
        $region28: #{gpt_embeddings_forward.1} parent=23 // pred_fallthru
          _
        %s126 = sand.u32 %s34, 1
        %s127 = scalar_lea.sflag [#allocation6], %s126
        %s128 = sand.u32 %s34, 1
        %s129 = smul.addr %s128, 8
        %s130 = scalar_lea.vmem [#allocation5], %s129
        %p131 = pneg %p47
        %p132 = pneg %p44
        %p133 = pneg %p73
        %p134 = pneg %p70
        %s135 = sand.u32 %s60, 1
        %s136 = scalar_lea.sflag [#allocation7], %s135
        %s137 = sand.u32 %s60, 1
        %s138 = smul.addr %s137, 16
        %s139 = scalar_lea.vmem [#allocation8], %s138
        %s140 = smul.u32 8, %s26
        %s141 = smul.u32 %s26, 16
        loop: start=0, step=1, limit=8
        $region29: #{gpt_embeddings_forward.1} parent=23 // loop_pre_header
          _
        $region30: #{gpt_embeddings_forward.1} parent=23 // loop_header
          %s143 = sphi 0, %s147
          %p144 = scmp.ge.s32.totalorder %s143, 8
        $region31: #{gpt_embeddings_forward.1} parent=23 // loop_header_branch
          %146 = sbr.rel (%p144) target = $region35
        $region32: #{gpt_embeddings_forward.1} parent=23 // loop_body
          %s148 = smul.u32 %s143, 2
          %s149 = sadd.s32 %s141, %s148
          %s150 = sld [smem:[#allocation4 + %s149]]
          %s151 = scalar_lea.vmem %s2, %s150
          %s152 = scalar_lea.vmem %s139, %s148 [#allocation8]
          %p154 = scmp.lt.u32.totalorder 1, 8
          %p155 = pneg %p154
          // Predicated region
          $region36: #{gpt_embeddings_forward.1} parent=32 // pred_check
            _
          $region37: #{gpt_embeddings_forward.1} parent=32 // pred_check_branch
            %157 = sbr.rel (%p154) target = $region39
          $region38: #{gpt_embeddings_forward.1} parent=32 // pred_region
            %s173 = sand.u32 1, 7
            %p174 = scmp.eq.s32.totalorder %s173, 0
            %p175 = pneg %p174
            // Predicated region
            $region51: #{gpt_embeddings_forward.1} parent=38 // pred_check
              _
            $region52: #{gpt_embeddings_forward.1} parent=38 // pred_check_branch
              %177 = sbr.rel (%p174) target = $region54
            $region53: #{gpt_embeddings_forward.1} parent=38 // pred_region
              %s178 = sand.u32 1, 7
              %s179 = ssub.s32 1, %s178
              %s180 = scalar_lea.vmem %s151, %s179
              %s181 = ssub.s32 1, %s178
              %s182 = scalar_lea.vmem %s152, %s181 [#allocation8]
              %s183 = sshll.u32 1, %s178
              %s184 = ssub.s32 %s183, 1
              loop: start=0, step=1, limit=1
              $region55: #{gpt_embeddings_forward.1} parent=53 // loop_pre_header
                _
              $region56: #{gpt_embeddings_forward.1} parent=53 // loop_header
                %s186 = sphi 0, %s190
                %p187 = scmp.ge.s32.totalorder %s186, 1
                %s191 = sphi %s180, %s180
                %s192 = sphi %s182, %s182
              $region57: #{gpt_embeddings_forward.1} parent=53 // loop_header_branch
                %189 = sbr.rel (%p187) target = $region61
              $region58: #{gpt_embeddings_forward.1} parent=53 // loop_body
                %v193 = vld [vmem:[%s191] sm:%s184]
                %194 = vst [vmem:[%s192] sm:%s184] %v193
              $region59: #{gpt_embeddings_forward.1} parent=53 // loop_footer
                %s190 = sadd.s32 1, %s186
              $region60: #{gpt_embeddings_forward.1} parent=53 // loop_footer_branch
                %185 = sbr.rel target = $region56
              $region61: #{gpt_embeddings_forward.1} parent=53 // loop_exit
                _
            $region54: #{gpt_embeddings_forward.1} parent=38 // pred_fallthru
              _
          $region39: #{gpt_embeddings_forward.1} parent=32 // pred_fallthru
            _
          // Predicated region
          $region40: #{gpt_embeddings_forward.1} parent=32 // pred_check
            %p158 = pneg %p154
          $region41: #{gpt_embeddings_forward.1} parent=32 // pred_check_branch
            %160 = sbr.rel (%p158) target = $region43
          $region42: #{gpt_embeddings_forward.1} parent=32 // pred_region
            %s161 = sshll.u32 1, 1
            %s162 = ssub.s32 %s161, 1
            loop: start=0, step=1, limit=1
            $region44: #{gpt_embeddings_forward.1} parent=42 // loop_pre_header
              _
            $region45: #{gpt_embeddings_forward.1} parent=42 // loop_header
              %s164 = sphi 0, %s168
              %p165 = scmp.ge.s32.totalorder %s164, 1
              %s169 = sphi %s151, %s151
              %s170 = sphi %s152, %s152
            $region46: #{gpt_embeddings_forward.1} parent=42 // loop_header_branch
              %167 = sbr.rel (%p165) target = $region50
            $region47: #{gpt_embeddings_forward.1} parent=42 // loop_body
              %v171 = vld [vmem:[%s169] sm:%s162]
              %172 = vst [vmem:[%s170] sm:%s162] %v171
            $region48: #{gpt_embeddings_forward.1} parent=42 // loop_footer
              %s168 = sadd.s32 1, %s164
            $region49: #{gpt_embeddings_forward.1} parent=42 // loop_footer_branch
              %163 = sbr.rel target = $region45
            $region50: #{gpt_embeddings_forward.1} parent=42 // loop_exit
              _
          $region43: #{gpt_embeddings_forward.1} parent=32 // pred_fallthru
            _
          // Predicated region
          $region62: #{gpt_embeddings_forward.1} parent=32 // pred_check
            _
          $region63: #{gpt_embeddings_forward.1} parent=32 // pred_check_branch
            %197 = sbr.rel (0) target = $region65
          $region64: #{gpt_embeddings_forward.1} parent=32 // pred_region
            %198 = vsyncadd [#allocation2], 16
          $region65: #{gpt_embeddings_forward.1} parent=32 // pred_fallthru
            _
          %s199 = sadd.s32 %s149, 1
          %s200 = sld [smem:[#allocation4 + %s199]]
          %s201 = scalar_lea.vmem %s2, %s200
          %s202 = sadd.s32 1, %s148
          %s203 = scalar_lea.vmem %s139, %s202 [#allocation8]
          %p205 = scmp.lt.u32.totalorder 1, 8
          %p206 = pneg %p205
          // Predicated region
          $region66: #{gpt_embeddings_forward.1} parent=32 // pred_check
            _
          $region67: #{gpt_embeddings_forward.1} parent=32 // pred_check_branch
            %208 = sbr.rel (%p205) target = $region69
          $region68: #{gpt_embeddings_forward.1} parent=32 // pred_region
            %s224 = sand.u32 1, 7
            %p225 = scmp.eq.s32.totalorder %s224, 0
            %p226 = pneg %p225
            // Predicated region
            $region81: #{gpt_embeddings_forward.1} parent=68 // pred_check
              _
            $region82: #{gpt_embeddings_forward.1} parent=68 // pred_check_branch
              %228 = sbr.rel (%p225) target = $region84
            $region83: #{gpt_embeddings_forward.1} parent=68 // pred_region
              %s229 = sand.u32 1, 7
              %s230 = ssub.s32 1, %s229
              %s231 = scalar_lea.vmem %s201, %s230
              %s232 = ssub.s32 1, %s229
              %s233 = scalar_lea.vmem %s203, %s232 [#allocation8]
              %s234 = sshll.u32 1, %s229
              %s235 = ssub.s32 %s234, 1
              loop: start=0, step=1, limit=1
              $region85: #{gpt_embeddings_forward.1} parent=83 // loop_pre_header
                _
              $region86: #{gpt_embeddings_forward.1} parent=83 // loop_header
                %s237 = sphi 0, %s241
                %p238 = scmp.ge.s32.totalorder %s237, 1
                %s242 = sphi %s231, %s231
                %s243 = sphi %s233, %s233
              $region87: #{gpt_embeddings_forward.1} parent=83 // loop_header_branch
                %240 = sbr.rel (%p238) target = $region91
              $region88: #{gpt_embeddings_forward.1} parent=83 // loop_body
                %v244 = vld [vmem:[%s242] sm:%s235]
                %245 = vst [vmem:[%s243] sm:%s235] %v244
              $region89: #{gpt_embeddings_forward.1} parent=83 // loop_footer
                %s241 = sadd.s32 1, %s237
              $region90: #{gpt_embeddings_forward.1} parent=83 // loop_footer_branch
                %236 = sbr.rel target = $region86
              $region91: #{gpt_embeddings_forward.1} parent=83 // loop_exit
                _
            $region84: #{gpt_embeddings_forward.1} parent=68 // pred_fallthru
              _
          $region69: #{gpt_embeddings_forward.1} parent=32 // pred_fallthru
            _
          // Predicated region
          $region70: #{gpt_embeddings_forward.1} parent=32 // pred_check
            %p209 = pneg %p205
          $region71: #{gpt_embeddings_forward.1} parent=32 // pred_check_branch
            %211 = sbr.rel (%p209) target = $region73
          $region72: #{gpt_embeddings_forward.1} parent=32 // pred_region
            %s212 = sshll.u32 1, 1
            %s213 = ssub.s32 %s212, 1
            loop: start=0, step=1, limit=1
            $region74: #{gpt_embeddings_forward.1} parent=72 // loop_pre_header
              _
            $region75: #{gpt_embeddings_forward.1} parent=72 // loop_header
              %s215 = sphi 0, %s219
              %p216 = scmp.ge.s32.totalorder %s215, 1
              %s220 = sphi %s201, %s201
              %s221 = sphi %s203, %s203
            $region76: #{gpt_embeddings_forward.1} parent=72 // loop_header_branch
              %218 = sbr.rel (%p216) target = $region80
            $region77: #{gpt_embeddings_forward.1} parent=72 // loop_body
              %v222 = vld [vmem:[%s220] sm:%s213]
              %223 = vst [vmem:[%s221] sm:%s213] %v222
            $region78: #{gpt_embeddings_forward.1} parent=72 // loop_footer
              %s219 = sadd.s32 1, %s215
            $region79: #{gpt_embeddings_forward.1} parent=72 // loop_footer_branch
              %214 = sbr.rel target = $region75
            $region80: #{gpt_embeddings_forward.1} parent=72 // loop_exit
              _
          $region73: #{gpt_embeddings_forward.1} parent=32 // pred_fallthru
            _
          // Predicated region
          $region92: #{gpt_embeddings_forward.1} parent=32 // pred_check
            _
          $region93: #{gpt_embeddings_forward.1} parent=32 // pred_check_branch
            %248 = sbr.rel (0) target = $region95
          $region94: #{gpt_embeddings_forward.1} parent=32 // pred_region
            %249 = vsyncadd [#allocation2], 16
          $region95: #{gpt_embeddings_forward.1} parent=32 // pred_fallthru
            _
        $region33: #{gpt_embeddings_forward.1} parent=23 // loop_footer
          %s147 = sadd.s32 1, %s143
        $region34: #{gpt_embeddings_forward.1} parent=23 // loop_footer_branch
          %142 = sbr.rel target = $region30
        $region35: #{gpt_embeddings_forward.1} parent=23 // loop_exit
          _
        loop: start=0, step=1, limit=8
        $region96: #{gpt_embeddings_forward.1} parent=23 // loop_pre_header
          _
        $region97: #{gpt_embeddings_forward.1} parent=23 // loop_header
          %s251 = sphi 0, %s255
          %p252 = scmp.ge.s32.totalorder %s251, 8
        $region98: #{gpt_embeddings_forward.1} parent=23 // loop_header_branch
          %254 = sbr.rel (%p252) target = $region102
        $region99: #{gpt_embeddings_forward.1} parent=23 // loop_body
          %s256 = smul.u32 %s251, 2
          %s257 = sadd.s32 %s141, %s256
          %s258 = sld [smem:[#allocation4 + %s257]]
          %s259 = smul.u32 1, 1
          %s260 = sshll.u32 %s259, 4
          %261 = dma.done [#allocation2], %s260
          %s262 = sadd.s32 %s257, 1
          %s263 = sld [smem:[#allocation4 + %s262]]
          %s264 = sshll.u32 %s259, 4
          %265 = dma.done [#allocation2], %s264
        $region100: #{gpt_embeddings_forward.1} parent=23 // loop_footer
          %s255 = sadd.s32 1, %s251
        $region101: #{gpt_embeddings_forward.1} parent=23 // loop_footer_branch
          %250 = sbr.rel target = $region97
        $region102: #{gpt_embeddings_forward.1} parent=23 // loop_exit
          _
        %v266 = vld [vmem:[%s139] sm:$0x3]
        %v267 = vld [vmem:[%s139 + $0x2] sm:$0x3]
        %v268 = vld [vmem:[%s139 + $0x4] sm:$0x3]
        %v269 = vld [vmem:[%s139 + $0x6] sm:$0x3]
        %v270 = vld [vmem:[%s139 + $0x8] sm:$0x3]
        %v271 = vld [vmem:[%s139 + $0xa] sm:$0x3]
        %v272 = vld [vmem:[%s139 + $0xc] sm:$0x3]
        %v273 = vld [vmem:[%s139 + $0xe] sm:$0x3]
        %v274 = vld [vmem:[%s121] sm:$0xff]
        %v276 = vcombine.high %v274, %v274
        %v278 = vunpack.c.l.s4 1966171168
        %v279 = vunpack.c.0.s8 %v278
        %v280 = vlaneseq
        %v281 = vshrl.u32 %v280, 7
        %v282 = vsub.s32 %v279, %v281
        %v283 = vrot.slane %v274, %v282
        %v285 = vunpack.c.l.s4 1966171168
        %v286 = vunpack.c.0.s8 %v285
        %v287 = vlaneseq
        %v288 = vshrl.u32 %v287, 7
        %v289 = vsub.s32 %v286, %v288
        %v290 = vrot.slane %v276, %v289
        %v291 = vcombine.high %v283, %v283
        %v292 = vcombine.high %v290, %v290
        %v294 = vunpack.c.l.s4 1966171168
        %v295 = vunpack.c.0.s8 %v294
        %v296 = vlaneseq
        %v297 = vshrl.u32 %v296, 7
        %v298 = vsub.s32 %v295, %v297
        %v299 = vrot.slane %v283, %v298
        %v301 = vunpack.c.l.s4 1966171168
        %v302 = vunpack.c.0.s8 %v301
        %v303 = vlaneseq
        %v304 = vshrl.u32 %v303, 7
        %v305 = vsub.s32 %v302, %v304
        %v306 = vrot.slane %v290, %v305
        %v308 = vunpack.c.l.s4 1966171168
        %v309 = vunpack.c.0.s8 %v308
        %v310 = vlaneseq
        %v311 = vshrl.u32 %v310, 7
        %v312 = vsub.s32 %v309, %v311
        %v313 = vrot.slane %v291, %v312
        %v315 = vunpack.c.l.s4 1966171168
        %v316 = vunpack.c.0.s8 %v315
        %v317 = vlaneseq
        %v318 = vshrl.u32 %v317, 7
        %v319 = vsub.s32 %v316, %v318
        %v320 = vrot.slane %v292, %v319
        %v321 = vcombine.high %v299, %v299
        %v322 = vcombine.high %v306, %v306
        %v323 = vcombine.high %v313, %v313
        %v324 = vcombine.high %v320, %v320
        %v325 = vlaneseq
        %v326 = vshrl.u32 %v325, 7
        %v327 = vsub.s32 0, %v326
        %v328 = vrot.slane %v299, %v327
        %v329 = vlaneseq
        %v330 = vshrl.u32 %v329, 7
        %v331 = vsub.s32 0, %v330
        %v332 = vrot.slane %v313, %v331
        %v333 = vlaneseq
        %v334 = vshrl.u32 %v333, 7
        %v335 = vsub.s32 0, %v334
        %v336 = vrot.slane %v321, %v335
        %v337 = vlaneseq
        %v338 = vshrl.u32 %v337, 7
        %v339 = vsub.s32 0, %v338
        %v340 = vrot.slane %v323, %v339
        %v341 = vlaneseq
        %v342 = vshrl.u32 %v341, 7
        %v343 = vsub.s32 0, %v342
        %v344 = vrot.slane %v306, %v343
        %v345 = vlaneseq
        %v346 = vshrl.u32 %v345, 7
        %v347 = vsub.s32 0, %v346
        %v348 = vrot.slane %v320, %v347
        %v349 = vlaneseq
        %v350 = vshrl.u32 %v349, 7
        %v351 = vsub.s32 0, %v350
        %v352 = vrot.slane %v322, %v351
        %v353 = vlaneseq
        %v354 = vshrl.u32 %v353, 7
        %v355 = vsub.s32 0, %v354
        %v356 = vrot.slane %v324, %v355
        %v365 = vadd.f32 %v266, %v328
        %v366 = vadd.f32 %v267, %v332
        %v367 = vadd.f32 %v268, %v336
        %v368 = vadd.f32 %v269, %v340
        %v369 = vadd.f32 %v270, %v344
        %v370 = vadd.f32 %v271, %v348
        %v371 = vadd.f32 %v272, %v352
        %v372 = vadd.f32 %v273, %v356
        %373 = vst [vmem:[%s139] sm:$0x3] %v365
        %374 = vst [vmem:[%s139 + $0x2] sm:$0x3] %v366
        %375 = vst [vmem:[%s139 + $0x4] sm:$0x3] %v367
        %376 = vst [vmem:[%s139 + $0x6] sm:$0x3] %v368
        %377 = vst [vmem:[%s139 + $0x8] sm:$0x3] %v369
        %378 = vst [vmem:[%s139 + $0xa] sm:$0x3] %v370
        %379 = vst [vmem:[%s139 + $0xc] sm:$0x3] %v371
        %380 = vst [vmem:[%s139 + $0xe] sm:$0x3] %v372
        %s381 = sand.u32 %s60, 1
        %s382 = scalar_lea.sflag [#allocation7], %s381
        %s383 = sand.u32 %s60, 1
        %s384 = smul.addr %s383, 16
        %s385 = scalar_lea.vmem [#allocation8], %s384
        // Predicated region
        $region103: #{gpt_embeddings_forward.1} parent=23 // pred_check
          %p386 = pneg %p70
        $region104: #{gpt_embeddings_forward.1} parent=23 // pred_check_branch
          %388 = sbr.rel (%p386) target = $region106
        $region105: #{gpt_embeddings_forward.1} parent=23 // pred_region
          %s389 = smul.u32 8, %s26
          %s391 = ssub.s32 256, 256
          %392 = vsyncadd %s382, %s391
          %s393 = smul.addr %s389, 32
          %s394 = scalar_lea.hbm %s3, %s393
          %s395 = sshll.u32 %s385, 4
          %s396 = int_to_ptr.vmem [resolvable:$true] %s395
          %401 = dma.vmem_to_hbm [thread:$0]  %s396, 256, %s394, %s382, 32, 32, 2
        $region106: #{gpt_embeddings_forward.1} parent=23 // pred_fallthru
          _
      $region24: #{gpt_embeddings_forward.1} parent=5 // pred_fallthru
        _
      %p402 = scmp.le.s32.totalorder 2, %s21
      // Predicated region
      $region107: #{gpt_embeddings_forward.1} parent=5 // pred_check
        %p403 = pneg %p402
      $region108: #{gpt_embeddings_forward.1} parent=5 // pred_check_branch
        %405 = sbr.rel (%p403) target = $region110
      $region109: #{gpt_embeddings_forward.1} parent=5 // pred_region
        %s406 = ssub.s32 %s21, 2
        // Predicated region
        $region111: #{gpt_embeddings_forward.1} parent=109 // pred_check
          %p407 = pneg %p76
        $region112: #{gpt_embeddings_forward.1} parent=109 // pred_check_branch
          %409 = sbr.rel (%p407) target = $region114
        $region113: #{gpt_embeddings_forward.1} parent=109 // pred_region
          %s410 = sand.u32 %s61, 1
          %s411 = scalar_lea.sflag [#allocation7], %s410
          %s412 = sand.u32 %s61, 1
          %s413 = smul.addr %s412, 16
          %s414 = scalar_lea.vmem [#allocation8], %s413
          %415 = dma.done %s411, 256
        $region114: #{gpt_embeddings_forward.1} parent=109 // pred_fallthru
          _
      $region110: #{gpt_embeddings_forward.1} parent=5 // pred_fallthru
        _
    $region6: #{gpt_embeddings_forward.1} parent=1 // loop_footer
      %s25 = sadd.s32 1, %s21
    $region7: #{gpt_embeddings_forward.1} parent=1 // loop_footer_branch
      %20 = sbr.rel target = $region3
    $region8: #{gpt_embeddings_forward.1} parent=1 // loop_exit
      _
    %416 = vsyncpa [#allocation6], 1
    %s417 = scalar_lea.sflag [#allocation6], 1
    %418 = vsyncpa %s417, 1
    %419 = vsyncpa [#allocation7], 1
    %s420 = scalar_lea.sflag [#allocation7], 1
    %421 = vsyncpa %s420, 1
  %422 = vsyncmov [#allocation2]
  %s423 = vpop.sfrf %422
  %p424 = scmp.eq.s32.totalorder %s423, 0
  %p425 = pneg %p424
  %427 = shalt.err (%p425)

</llo_original>
